<compile_context>
chip_gen: v5e
topology: v5e:2x2
jax: 0.10.0
libtpu: 0.0.40
codegen_flags: <defaults>
</compile_context>

<pallas_src>
import functools
import math

import jax
import jax.numpy as jnp
from jax import lax
from jax.experimental import pallas as pl
from jax.experimental.pallas import tpu as pltpu


_NEG_INF = -1e30  # finite mask fill: no NaN even if a row were ever fully masked
_MIB = 1024 * 1024


def _largest_aligned_divisor(n, preferred):
    """Largest block <= preferred dividing n; prefer multiples of 128, then 16, then 8."""
    if n <= preferred:
        return n
    for align in (128, 16, 8):
        b = (preferred // align) * align
        while b >= align:
            if n % b == 0:
                return b
            b -= align
    return n


def _compiler_params(semantics, resident_bytes):
    """Explicit VMEM budget (default scoped limits: 16/32/32 MiB on v5e/v6e/v7x)."""
    limit = int(min(128 * _MIB, max(32 * _MIB, 2 * resident_bytes)))
    return pltpu.CompilerParams(dimension_semantics=semantics,
                                vmem_limit_bytes=limit)


# ---------------------------------------------------------------------------
# Phase 1: QKV projection -- one lane-dense [t_blk, C] @ [C, 3C] matmul per tile.
# ---------------------------------------------------------------------------
def _qkv_proj_kernel(x_ref, w_ref, b_ref, qkv_ref):
    # x_ref: [1, t_blk, C]; w_ref: [C, 3C]; b_ref: [1, 3C] f32; qkv_ref: [1, t_blk, 3C].
    y = jnp.dot(x_ref[0], w_ref[...], preferred_element_type=jnp.float32)
    qkv_ref[0] = (y + b_ref[...]).astype(qkv_ref.dtype)


# ---------------------------------------------------------------------------
# Phase 2: flash-style causal attention, block_kv decoupled from block_q,
# unmasked KV tiles processed without any iota/compare/select.
# ---------------------------------------------------------------------------
def _flash_attn_kernel(q_ref, k_ref, v_ref, o_ref, *, scale, block_kv, q_axis,
                       approx_recip):
    # q_ref/o_ref: [1, block_q, hd]; k_ref/v_ref: [1, T, hd] (resident per head).
    qi = pl.program_id(q_axis)
    # Fold the 1/sqrt(hd) scale into q once (saves a [block_q, block_kv] VALU mul
    # per KV tile).
    q = (q_ref[0].astype(jnp.float32) * scale).astype(q_ref.dtype)  # [block_q, hd]
    block_q, hd = q.shape

    q_start = qi * block_q
    # KV tiles entirely below the diagonal need no mask; tiles straddling it do;
    # tiles entirely above it are never visited (causal block skipping).
    num_unmasked = (q_start + 1) // block_kv
    num_visit = (q_start + block_q - 1) // block_kv + 1

    m0 = jnp.full((block_q, 1), _NEG_INF, jnp.float32)
    l0 = jnp.zeros((block_q, 1), jnp.float32)
    acc0 = jnp.zeros((block_q, hd), jnp.float32)

    def tile_update(kv, carry, masked):
        m, l, acc = carry
        start = pl.multiple_of(kv * block_kv, block_kv)
        k = k_ref[0, pl.ds(start, block_kv), :]                 # [block_kv, hd]
        v = v_ref[0, pl.ds(start, block_kv), :]
        # Contract the hd axis of both operands directly -> no explicit K transpose.
        s = lax.dot_general(q, k, (((1,), (1,)), ((), ())),
                            preferred_element_type=jnp.float32)  # [block_q, block_kv]
        if masked:
            row = q_start + lax.broadcasted_iota(jnp.int32, (block_q, block_kv), 0)
            col = start + lax.broadcasted_iota(jnp.int32, (block_q, block_kv), 1)
            s = jnp.where(row >= col, s, _NEG_INF)
        # Online softmax; statistics and accumulation in f32.
        m_new = jnp.maximum(m, s.max(axis=-1, keepdims=True))
        alpha = jnp.exp(m - m_new)
        p = jnp.exp(s - m_new)
        l_new = alpha * l + p.sum(axis=-1, keepdims=True)
        acc_new = alpha * acc + jnp.dot(p.astype(v.dtype), v,
                                        preferred_element_type=jnp.float32)
        return m_new, l_new, acc_new

    carry = lax.fori_loop(0, num_unmasked,
                          functools.partial(tile_update, masked=False),
                          (m0, l0, acc0))
    carry = lax.fori_loop(num_unmasked, num_visit,
                          functools.partial(tile_update, masked=True), carry)
    m, l, acc = carry
    # Normalize with an EUP reciprocal instead of a VALU divide.
    o_ref[0] = (acc * pl.reciprocal(l, approx=approx_recip)).astype(o_ref.dtype)


# ---------------------------------------------------------------------------
# Phase 3: output projection -- one [t_blk, C] @ [C, C] matmul + bias per tile.
# ---------------------------------------------------------------------------
def _out_proj_kernel(y_ref, w_ref, b_ref, o_ref):
    out = jnp.dot(y_ref[0], w_ref[...], preferred_element_type=jnp.float32) + b_ref[...]
    o_ref[0] = out.astype(o_ref.dtype)


def causal_self_attention(x, w_attn, b_attn, w_proj, b_proj, *, n_head,
                          block_q=128, block_kv=256, compute_dtype=jnp.bfloat16):
    """x: [B, T, C]; w_attn: [C, 3C]; b_attn: [3C]; w_proj: [C, C]; b_proj: [C].

    compute_dtype: MXU operand dtype (bf16 recommended; f32 stats/accum always).
    block_q: query tile (keep 128 so f32 online-softmax carries stay in vregs).
    block_kv: KV tile (N of Q.K^T / K of P.V): 256-512 on v6e/v7x, 128-256 on v5e.
    """
    B, T, C = x.shape
    assert C % n_head == 0
    hd = C // n_head
    cdt = compute_dtype
    dsz = jnp.dtype(cdt).itemsize

    # One-time casts / bias reshapes (plain XLA outside the kernels).
    x_c = x.astype(cdt)
    w_qkv = w_attn.astype(cdt)                                   # [C, 3C]
    b_qkv = b_attn.reshape(1, 3 * C).astype(jnp.float32)         # [1, 3C]
    w_p = w_proj.astype(cdt)                                     # [C, C]
    b_p = b_proj.reshape(1, C).astype(jnp.float32)               # [1, C]

    # ---- 1) QKV projection: grid (B, T // t_blk), lane-dense [t_blk, 3C] output ----
    t_blk = _largest_aligned_divisor(T, 256)
    qkv_bytes = 2 * (t_blk * C * dsz + 3 * C * C * dsz + 3 * C * 4 + 3 * t_blk * C * dsz)
    # TODO(synk): on v7x with very large C, mark the constant-index weight spec
    # pipeline_mode=pl.Buffered(1) (it never changes) and tile the 3C/N axis.
    qkv = pl.pallas_call(
        _qkv_proj_kernel,
        out_shape=jax.ShapeDtypeStruct((B, T, 3 * C), cdt),
        grid=(B, T // t_blk),
        in_specs=[
            pl.BlockSpec((1, t_blk, C), lambda b, t: (b, t, 0)),
            pl.BlockSpec((C, 3 * C), lambda b, t: (0, 0)),       # constant index
            pl.BlockSpec((1, 3 * C), lambda b, t: (0, 0)),
        ],
        out_specs=pl.BlockSpec((1, t_blk, 3 * C), lambda b, t: (b, t, 0)),
        compiler_params=_compiler_params(("parallel", "parallel"), qkv_bytes),
    )(x_c, w_qkv, b_qkv)

    # ---- 2) Flash-style causal attention -----------------------------------------
    q_blk = _largest_aligned_divisor(T, block_q)
    kv_blk = _largest_aligned_divisor(T, block_kv)
    scale = 1.0 / math.sqrt(hd)
    approx = (cdt != jnp.float32)
    attn_bytes = 2 * (2 * q_blk * hd * dsz + 2 * T * hd * dsz)
    # TODO(synk): for very long T (v7x 64 MiB VMEM), tile K/V via an extra
    # "arbitrary" grid axis with m/l/acc VMEM scratch instead of resident [T, hd].

    if hd % 128 == 0:
        # Lane-dense path: read q/k/v straight from the [B, T, 3C] slab and write a
        # [B, T, C] output -- no XLA head-split or head-merge transposes at all.
        kern = functools.partial(_flash_attn_kernel, scale=scale, block_kv=kv_blk,
                                 q_axis=2, approx_recip=approx)
        y = pl.pallas_call(
            kern,
            out_shape=jax.ShapeDtypeStruct((B, T, C), cdt),
            grid=(B, n_head, T // q_blk),
            in_specs=[
                pl.BlockSpec((1, q_blk, hd), lambda b, h, i: (b, i, h)),
                pl.BlockSpec((1, T, hd), lambda b, h, i: (b, 0, n_head + h)),
                pl.BlockSpec((1, T, hd), lambda b, h, i: (b, 0, 2 * n_head + h)),
            ],
            out_specs=pl.BlockSpec((1, q_blk, hd), lambda b, h, i: (b, i, h)),
            compiler_params=_compiler_params(
                ("parallel", "parallel", "parallel"), attn_bytes),
        )(qkv, qkv, qkv)
    else:
        # hd < 128: an hd-wide lane block would violate the 128-lane constraint, so
        # do the head split/merge as XLA layout plumbing around the kernel.
        qkv_h = qkv.reshape(B, T, 3, n_head, hd).transpose(2, 0, 3, 1, 4)
        q = qkv_h[0].reshape(B * n_head, T, hd)
        k = qkv_h[1].reshape(B * n_head, T, hd)
        v = qkv_h[2].reshape(B * n_head, T, hd)
        kern = functools.partial(_flash_attn_kernel, scale=scale, block_kv=kv_blk,
                                 q_axis=1, approx_recip=approx)
        y = pl.pallas_call(
            kern,
            out_shape=jax.ShapeDtypeStruct((B * n_head, T, hd), cdt),
            grid=(B * n_head, T // q_blk),
            in_specs=[
                pl.BlockSpec((1, q_blk, hd), lambda bh, i: (bh, i, 0)),
                pl.BlockSpec((1, T, hd), lambda bh, i: (bh, 0, 0)),
                pl.BlockSpec((1, T, hd), lambda bh, i: (bh, 0, 0)),
            ],
            out_specs=pl.BlockSpec((1, q_blk, hd), lambda bh, i: (bh, i, 0)),
            compiler_params=_compiler_params(("parallel", "parallel"), attn_bytes),
        )(q, k, v)
        y = y.reshape(B, n_head, T, hd).transpose(0, 2, 1, 3).reshape(B, T, C)

    # ---- 3) Output projection: one [t_blk, C] @ [C, C] matmul per tile ------------
    p_blk = _largest_aligned_divisor(T, 256)
    proj_bytes = 2 * (p_blk * C * dsz + C * C * dsz + C * 4
                      + p_blk * C * jnp.dtype(x.dtype).itemsize)
    out = pl.pallas_call(
        _out_proj_kernel,
        out_shape=jax.ShapeDtypeStruct((B, T, C), x.dtype),
        grid=(B, T // p_blk),
        in_specs=[
            pl.BlockSpec((1, p_blk, C), lambda b, t: (b, t, 0)),
            pl.BlockSpec((C, C), lambda b, t: (0, 0)),           # constant index
            pl.BlockSpec((1, C), lambda b, t: (0, 0)),
        ],
        out_specs=pl.BlockSpec((1, p_blk, C), lambda b, t: (b, t, 0)),
        compiler_params=_compiler_params(("parallel", "parallel"), proj_bytes),
    )(y, w_p, b_p)
    # TODO(synk): attn_dropout / resid_dropout are identity in eval mode; omitted.
    return out


def _reference(x, w_attn, b_attn, w_proj, b_proj, n_head):
    """Pure-JAX reference matching the PyTorch forward (eval mode), all f32."""
    B, T, C = x.shape
    hd = C // n_head
    qkv = x @ w_attn + b_attn
    q, k, v = jnp.split(qkv, 3, axis=-1)

    def heads(t):
        return t.reshape(B, T, n_head, hd).transpose(0, 2, 1, 3)

    q, k, v = heads(q), heads(k), heads(v)
    att = (q @ k.transpose(0, 1, 3, 2)) * (1.0 / math.sqrt(hd))
    mask = jnp.tril(jnp.ones((T, T), dtype=bool))
    att = jnp.where(mask[None, None], att, -jnp.inf)
    att = jax.nn.softmax(att, axis=-1)
    y = (att @ v).transpose(0, 2, 1, 3).reshape(B, T, C)
    return y @ w_proj + b_proj


def _check(B, T, C, n_head, key):
    kx, kwa, kba, kwp, kbp = jax.random.split(key, 5)
    # PyTorch nn.Linear default init: U(-1/sqrt(fan_in), 1/sqrt(fan_in)).
    bound = 1.0 / math.sqrt(C)
    x = jax.random.normal(kx, (B, T, C), dtype=jnp.float32)
    w_attn = jax.random.uniform(kwa, (C, 3 * C), jnp.float32, -bound, bound)
    b_attn = jax.random.uniform(kba, (3 * C,), jnp.float32, -bound, bound)
    w_proj = jax.random.uniform(kwp, (C, C), jnp.float32, -bound, bound)
    b_proj = jax.random.uniform(kbp, (C,), jnp.float32, -bound, bound)

    ref = _reference(x, w_attn, b_attn, w_proj, b_proj, n_head)

    # Strict structural check with f32 compute.
    out_f32 = jax.block_until_ready(causal_self_attention(
        x, w_attn, b_attn, w_proj, b_proj, n_head=n_head,
        compute_dtype=jnp.float32))
    assert out_f32.shape == (B, T, C)
    assert jnp.allclose(out_f32, ref, atol=2e-3, rtol=2e-3), \
        f"f32 path mismatch vs reference (B={B},T={T},C={C},nh={n_head})"

    # Default path: bf16 MXU operands, f32 accumulation.
    out_bf = jax.block_until_ready(causal_self_attention(
        x, w_attn, b_attn, w_proj, b_proj, n_head=n_head))
    assert out_bf.shape == (B, T, C)
    assert jnp.allclose(out_bf, ref, atol=7e-2, rtol=7e-2), \
        f"bf16 path mismatch vs reference (B={B},T={T},C={C},nh={n_head})"


if __name__ == "__main__":
    key = jax.random.PRNGKey(0)
    k1, k2 = jax.random.split(key)
    # hd = 8  -> fallback path (XLA head split/merge around the flash kernel).
    _check(2, 8, 32, 4, k1)
    # hd = 128 -> lane-dense path (q/k/v read from [B,T,3C], output written to [B,T,C]).
    _check(1, 16, 256, 2, k2)
    print("KERNEL_OK")
</pallas_src>

<mosaic_0001>
module attributes {stable_mosaic.version = 11 : i64} {
  func.func @_qkv_proj_kernel(%arg0: i32, %arg1: i32, %arg2: memref<1x8x32xf32, #tpu.memory_space<vmem>>, %arg3: memref<32x96xf32, #tpu.memory_space<vmem>>, %arg4: memref<1x96xf32, #tpu.memory_space<vmem>>, %arg5: memref<1x8x96xf32, #tpu.memory_space<vmem>>) attributes {dimension_semantics = [#tpu.dimension_semantics<parallel>, #tpu.dimension_semantics<parallel>], iteration_bounds = array<i64: 2, 1>, scalar_prefetch = 0 : i64, scratch_operands = 0 : i64, tpu.core_type = #tpu.core_type<tc>, window_params = [{transform_indices = @transform_0, window_bounds = array<i64: 1, 8, 32>}, {pipeline_mode = #tpu.pipeline_mode<synchronous>, transform_indices = @transform_1, window_bounds = array<i64: 32, 96>}, {pipeline_mode = #tpu.pipeline_mode<synchronous>, transform_indices = @transform_2, window_bounds = array<i64: 1, 96>}, {transform_indices = @transform_3, window_bounds = array<i64: 1, 8, 96>}]} {
    %c0 = arith.constant 0 : index
    %c0_0 = arith.constant 0 : index
    %c0_1 = arith.constant 0 : index
    %0 = vector.load %arg2[%c0, %c0_0, %c0_1] : memref<1x8x32xf32, #tpu.memory_space<vmem>>, vector<1x8x32xf32>
    %1 = vector.shape_cast %0 : vector<1x8x32xf32> to vector<8x32xf32>
    %c0_2 = arith.constant 0 : index
    %c0_3 = arith.constant 0 : index
    %2 = vector.load %arg3[%c0_2, %c0_3] : memref<32x96xf32, #tpu.memory_space<vmem>>, vector<32x96xf32>
    %cst = arith.constant dense<0.000000e+00> : vector<8x96xf32>
    %3 = tpu.matmul %1, %2, %cst {dimension_numbers = #tpu.dot_dimension_numbers<[1], [0], [0], [1], [0, 0, 1, 1], [], []>} : vector<8x32xf32>, vector<32x96xf32>, vector<8x96xf32> -> vector<8x96xf32>
    %c0_4 = arith.constant 0 : index
    %c0_5 = arith.constant 0 : index
    %4 = vector.load %arg4[%c0_4, %c0_5] : memref<1x96xf32, #tpu.memory_space<vmem>>, vector<1x96xf32>
    %5 = vector.broadcast %4 : vector<1x96xf32> to vector<8x96xf32>
    %6 = arith.addf %3, %5 : vector<8x96xf32>
    %c0_6 = arith.constant 0 : index
    %c0_7 = arith.constant 0 : index
    %c0_8 = arith.constant 0 : index
    %7 = vector.load %arg5[%c0_6, %c0_7, %c0_8] : memref<1x8x96xf32, #tpu.memory_space<vmem>>, vector<1x8x96xf32>
    %8 = vector.shape_cast %7 : vector<1x8x96xf32> to vector<8x96xf32>
    %9 = vector.shape_cast %6 : vector<8x96xf32> to vector<1x8x96xf32>
    tpu.vector_store %arg5[%c0_6, %c0_7, %c0_8], %9 {strides = array<i32>} : memref<1x8x96xf32, #tpu.memory_space<vmem>>, vector<1x8x96xf32>,
    return
  }
  func.func @transform_0(%arg0: i32, %arg1: i32) -> (i32, i32, i32) {
    %c0_i32 = arith.constant 0 : i32
    %c0_i32_0 = arith.constant 0 : i32
    return %arg0, %arg1, %c0_i32 : i32, i32, i32
  }
  func.func @transform_1(%arg0: i32, %arg1: i32) -> (i32, i32) {
    %c0_i32 = arith.constant 0 : i32
    %c0_i32_0 = arith.constant 0 : i32
    %c0_i32_1 = arith.constant 0 : i32
    return %c0_i32, %c0_i32_0 : i32, i32
  }
  func.func @transform_2(%arg0: i32, %arg1: i32) -> (i32, i32) {
    %c0_i32 = arith.constant 0 : i32
    %c0_i32_0 = arith.constant 0 : i32
    %c0_i32_1 = arith.constant 0 : i32
    return %c0_i32, %c0_i32_0 : i32, i32
  }
  func.func @transform_3(%arg0: i32, %arg1: i32) -> (i32, i32, i32) {
    %c0_i32 = arith.constant 0 : i32
    %c0_i32_0 = arith.constant 0 : i32
    return %arg0, %arg1, %c0_i32 : i32, i32, i32
  }
}

</mosaic_0001>

<llo_original>
// kernel: tpu_custom_call.1
$region0: #{tpu_custom_call.1}
  #allocation0 [shape = 'u32[]', space=smem, size = 0x4, offset = 0x4, fixed_abs, tag = 'smem constant byte address 0x4 - core index']
  #allocation1 [shape = 'u32[72,128]{1,0:T(1,128)}', space=vmem, size = 0x9000, scoped, tag = 'internal scratch']
  %s0 = inlined_call_operand.hbm [shape: f32[2,8,32], index: 0, kind: input, shape index: {}]
  %s1 = inlined_call_operand.hbm [shape: f32[32,96], index: 1, kind: input, shape index: {}]
  %s2 = inlined_call_operand.vmem [shape: f32[1,96], index: 2, kind: input, shape index: {}]
  %s3 = inlined_call_operand.hbm [shape: f32[2,8,96], index: 3, kind: output, shape index: {}]
  %s4 = sld [smem:[#allocation0]]
  $region53: #{tpu_custom_call.1} parent=0
    _
  %s6 = ssub.s32 1, %s4
  %s7 = scalar_select 0, %s6, %s4
  $region1: #{tpu_custom_call.1} parent=0
    #allocation2 [shape = 'u8[8192]{0}', space=vmem, size = 0x2000, scoped, tag = 'input window, operand 0']
    #allocation3 [shape = 's32[2]{0}', space=sflag, size = 0x8, scoped, tag = 'scoped memory for tpu_custom_call.1']
    #allocation4 [shape = 's32[2]{0}', space=sflag, size = 0x8, scoped, tag = 'scoped memory for tpu_custom_call.1']
    #allocation5 [shape = 'u8[16384]{0}', space=vmem, size = 0x4000, scoped, tag = 'input window, operand 1, single buffered']
    #allocation6 [shape = 's32[1]{0}', space=sflag, size = 0x4, scoped, tag = 'scoped memory for tpu_custom_call.1']
    #allocation7 [shape = 'u8[8192]{0}', space=vmem, size = 0x2000, scoped, tag = 'output window, operand 0']
    %8 = vsyncpa [#allocation3], 0
    %s9 = scalar_lea.sflag [#allocation3], 1
    %10 = vsyncpa %s9, 0
    %11 = vsyncpa [#allocation6], 0
    %12 = vsyncpa [#allocation4], 0
    %s13 = scalar_lea.sflag [#allocation4], 1
    %14 = vsyncpa %s13, 0
    loop: start=0, step=1, limit=4
    $region2: #{tpu_custom_call.1} parent=1 // loop_pre_header
      _
    $region3: #{tpu_custom_call.1} parent=1 // loop_header
      %s16 = sphi 0, %s20
      %p17 = scmp.ge.s32.totalorder %s16, 4
      %s23 = sphi 0, %s35
      %s24 = sphi 0, %s31
      %s25 = sphi 0, %s23
      %s26 = sphi 0, %s24
      %s27 = sphi 0, %s25
      %s28 = sphi 0, %s26
      %s40 = sphi 0, %s42
      %s43 = sphi 0, %s40
      %s44 = sphi 0, %s43
      %s60 = sphi 0, %s44
      %s64 = sphi 0, %s64
      %s66 = sphi 0, %s64
      %s67 = sphi 0, %s66
      %s81 = sphi 0, %s67
      %s85 = sphi 0, %s85
      %s87 = sphi 0, %s85
      %s88 = sphi 0, %s87
      %s102 = sphi 0, %s88
      %s110 = sphi 0, %s112
      %s113 = sphi 0, %s110
      %s114 = sphi 0, %s113
      %s130 = sphi 0, %s114
    $region4: #{tpu_custom_call.1} parent=1 // loop_header_branch
      %19 = sbr.rel (%p17) target = $region8
    $region5: #{tpu_custom_call.1} parent=1 // loop_body
      %s21 = ssub.s32 %s16, 1
      %s22 = ssub.s32 %s16, 2
      %s29 = sadd.s32 1, %s24
      %p30 = scmp.ge.s32.totalorder %s29, 1
      %s31 = scalar_select %p30, 0, %s29
      %s32 = sadd.s32 1, %s23
      %s33 = scalar_select %p30, %s32, %s23
      %p34 = scmp.ge.s32.totalorder %s33, 2
      %s35 = scalar_select %p34, 0, %s33
      %s36 = ssub.s32 %s23, %s35
      %s37 = ssub.s32 %s24, %s31
      %s38 = sor.u32 %s36, %s37
      %p39 = scmp.eq.s32.totalorder %s38, 0
      %s41 = sadd.s32 %s40, 1
      %s42 = scalar_select %p39, %s40, %s41
      %p45 = pneg %p39
      %p46 = scmp.eq.s32.totalorder %s16, 1
      %p47 = por %p45, %p46
      %p48 = scmp.ne.s32.totalorder %s40, %s43
      %p49 = scmp.eq.s32.totalorder %s16, 0
      %p50 = por %p48, %p49
      %p51 = scmp.ne.s32.totalorder %s40, %s43
      %p52 = scmp.eq.s32.totalorder %s21, 1
      %p53 = por %p51, %p52
      %p54 = scmp.ne.s32.totalorder %s43, %s44
      %p55 = scmp.eq.s32.totalorder %s21, 0
      %p56 = por %p54, %p55
      %p57 = scmp.ne.s32.totalorder %s43, %s44
      %p58 = scmp.eq.s32.totalorder %s22, 1
      %p59 = por %p57, %p58
      %p61 = scmp.ne.s32.totalorder %s44, %s60
      %p62 = scmp.eq.s32.totalorder %s22, 0
      %p63 = por %p61, %p62
      %s65 = sadd.s32 %s64, 1
      %p68 = scmp.eq.s32.totalorder %s16, 1
      %p69 = scmp.ne.s32.totalorder %s64, %s66
      %p70 = scmp.eq.s32.totalorder %s16, 0
      %p71 = por %p69, %p70
      %p72 = scmp.ne.s32.totalorder %s64, %s66
      %p73 = scmp.eq.s32.totalorder %s21, 1
      %p74 = por %p72, %p73
      %p75 = scmp.ne.s32.totalorder %s66, %s67
      %p76 = scmp.eq.s32.totalorder %s21, 0
      %p77 = por %p75, %p76
      %p78 = scmp.ne.s32.totalorder %s66, %s67
      %p79 = scmp.eq.s32.totalorder %s22, 1
      %p80 = por %p78, %p79
      %p82 = scmp.ne.s32.totalorder %s67, %s81
      %p83 = scmp.eq.s32.totalorder %s22, 0
      %p84 = por %p82, %p83
      %s86 = sadd.s32 %s85, 1
      %p89 = scmp.eq.s32.totalorder %s16, 1
      %p90 = scmp.ne.s32.totalorder %s85, %s87
      %p91 = scmp.eq.s32.totalorder %s16, 0
      %p92 = por %p90, %p91
      %p93 = scmp.ne.s32.totalorder %s85, %s87
      %p94 = scmp.eq.s32.totalorder %s21, 1
      %p95 = por %p93, %p94
      %p96 = scmp.ne.s32.totalorder %s87, %s88
      %p97 = scmp.eq.s32.totalorder %s21, 0
      %p98 = por %p96, %p97
      %p99 = scmp.ne.s32.totalorder %s87, %s88
      %p100 = scmp.eq.s32.totalorder %s22, 1
      %p101 = por %p99, %p100
      %p103 = scmp.ne.s32.totalorder %s88, %s102
      %p104 = scmp.eq.s32.totalorder %s22, 0
      %p105 = por %p103, %p104
      %s106 = ssub.s32 %s23, %s35
      %s107 = ssub.s32 %s24, %s31
      %s108 = sor.u32 %s106, %s107
      %p109 = scmp.eq.s32.totalorder %s108, 0
      %s111 = sadd.s32 %s110, 1
      %s112 = scalar_select %p109, %s110, %s111
      %p115 = pneg %p109
      %p116 = scmp.eq.s32.totalorder %s16, 1
      %p117 = por %p115, %p116
      %p118 = scmp.ne.s32.totalorder %s110, %s113
      %p119 = scmp.eq.s32.totalorder %s16, 0
      %p120 = por %p118, %p119
      %p121 = scmp.ne.s32.totalorder %s110, %s113
      %p122 = scmp.eq.s32.totalorder %s21, 1
      %p123 = por %p121, %p122
      %p124 = scmp.ne.s32.totalorder %s113, %s114
      %p125 = scmp.eq.s32.totalorder %s21, 0
      %p126 = por %p124, %p125
      %p127 = scmp.ne.s32.totalorder %s113, %s114
      %p128 = scmp.eq.s32.totalorder %s22, 1
      %p129 = por %p127, %p128
      %p131 = scmp.ne.s32.totalorder %s114, %s130
      %p132 = scmp.eq.s32.totalorder %s22, 0
      %p133 = por %p131, %p132
      %p134 = scmp.le.s32.totalorder 1, %s16
      %p135 = scmp.lt.s32.totalorder %s16, 3
      %p136 = pnand %p134, %p135
      %p137 = pneg %p136
      // Predicated region
      $region9: #{tpu_custom_call.1} parent=5 // pred_check
        _
      $region10: #{tpu_custom_call.1} parent=5 // pred_check_branch
        %139 = sbr.rel (%p136) target = $region12
      $region11: #{tpu_custom_call.1} parent=5 // pred_region
        %s140 = ssub.s32 %s16, 1
        // Predicated region
        $region13: #{tpu_custom_call.1} parent=11 // pred_check
          %p141 = pneg %p77
        $region14: #{tpu_custom_call.1} parent=11 // pred_check_branch
          %143 = sbr.rel (%p141) target = $region16
        $region15: #{tpu_custom_call.1} parent=11 // pred_region
          %145 = vsyncadd [#allocation6], 0
          %s146 = sshll.u32 %s1, 4
          %s147 = int_to_ptr.hbm [resolvable:$true] %s146
          %s148 = sshll.u32 [#allocation5], 4
          %s149 = int_to_ptr.vmem [resolvable:$true] %s148
          %154 = dma.hbm_to_vmem [thread:$0]  %s147, 512, %s149, [#allocation6], 128, 128, 8
        $region16: #{tpu_custom_call.1} parent=11 // pred_fallthru
          _
        // Predicated region
        $region17: #{tpu_custom_call.1} parent=11 // pred_check
          %p155 = pneg %p98
        $region18: #{tpu_custom_call.1} parent=11 // pred_check_branch
          %157 = sbr.rel (%p155) target = $region20
        $region19: #{tpu_custom_call.1} parent=11 // pred_region
          _
        $region20: #{tpu_custom_call.1} parent=11 // pred_fallthru
          _
      $region12: #{tpu_custom_call.1} parent=5 // pred_fallthru
        _
      %p158 = scmp.lt.s32.totalorder %s16, 2
      // Predicated region
      $region21: #{tpu_custom_call.1} parent=5 // pred_check
        %p159 = pneg %p158
      $region22: #{tpu_custom_call.1} parent=5 // pred_check_branch
        %161 = sbr.rel (%p159) target = $region24
      $region23: #{tpu_custom_call.1} parent=5 // pred_region
        // Predicated region
        $region25: #{tpu_custom_call.1} parent=23 // pred_check
          %p162 = pneg %p50
        $region26: #{tpu_custom_call.1} parent=23 // pred_check_branch
          %164 = sbr.rel (%p162) target = $region28
        $region27: #{tpu_custom_call.1} parent=23 // pred_region
          %s165 = sand.u32 %s40, 1
          %s166 = scalar_lea.sflag [#allocation3], %s165
          %s167 = sand.u32 %s40, 1
          %s168 = smul.addr %s167, 8
          %s169 = scalar_lea.vmem [#allocation2], %s168
          %171 = vsyncadd %s166, 0
          %s172 = sadd.s32 %s24, %s23
          %s173 = smul.addr %s172, 8
          %s174 = scalar_lea.hbm %s0, %s173
          %s176 = sshll.u32 %s174, 4
          %s177 = int_to_ptr.hbm [resolvable:$true] %s176
          %s178 = sshll.u32 %s169, 4
          %s179 = int_to_ptr.vmem [resolvable:$true] %s178
          %181 = dma.hbm_to_vmem [thread:$0]  %s177, 128, %s179, %s166
        $region28: #{tpu_custom_call.1} parent=23 // pred_fallthru
          _
      $region24: #{tpu_custom_call.1} parent=5 // pred_fallthru
        _
      %p182 = scmp.le.s32.totalorder 1, %s16
      %p183 = scmp.lt.s32.totalorder %s16, 3
      %p184 = pnand %p182, %p183
      %p185 = pneg %p184
      // Predicated region
      $region29: #{tpu_custom_call.1} parent=5 // pred_check
        _
      $region30: #{tpu_custom_call.1} parent=5 // pred_check_branch
        %187 = sbr.rel (%p184) target = $region32
      $region31: #{tpu_custom_call.1} parent=5 // pred_region
        %s188 = ssub.s32 %s16, 1
        %s189 = sand.u32 %s43, 1
        %s190 = scalar_lea.sflag [#allocation3], %s189
        %s191 = sand.u32 %s43, 1
        %s192 = smul.addr %s191, 8
        %s193 = scalar_lea.vmem [#allocation2], %s192
        // Predicated region
        $region33: #{tpu_custom_call.1} parent=31 // pred_check
          %p194 = pneg %p56
        $region34: #{tpu_custom_call.1} parent=31 // pred_check_branch
          %196 = sbr.rel (%p194) target = $region36
        $region35: #{tpu_custom_call.1} parent=31 // pred_region
          %198 = dma.done %s190, 128
        $region36: #{tpu_custom_call.1} parent=31 // pred_fallthru
          _
        // Predicated region
        $region37: #{tpu_custom_call.1} parent=31 // pred_check
          %p199 = pneg %p77
        $region38: #{tpu_custom_call.1} parent=31 // pred_check_branch
          %201 = sbr.rel (%p199) target = $region40
        $region39: #{tpu_custom_call.1} parent=31 // pred_region
          %203 = dma.done [#allocation6], 512
        $region40: #{tpu_custom_call.1} parent=31 // pred_fallthru
          _
        %s204 = sand.u32 %s43, 1
        %s205 = scalar_lea.sflag [#allocation3], %s204
        %s206 = sand.u32 %s43, 1
        %s207 = smul.addr %s206, 8
        %s208 = scalar_lea.vmem [#allocation2], %s207
        %p209 = pneg %p56
        %p210 = pneg %p53
        %p211 = pneg %p77
        %p212 = pneg %p74
        %p213 = pneg %p98
        %p214 = pneg %p95
        %p215 = pneg %p126
        %p216 = pneg %p123
        %s217 = sand.u32 %s113, 1
        %s218 = scalar_lea.sflag [#allocation4], %s217
        %s219 = sand.u32 %s113, 1
        %s220 = smul.addr %s219, 8
        %s221 = scalar_lea.vmem [#allocation7], %s220
        %v222 = vld [vmem:[%s193] sm:$0xff]
        %v223 = vld [vmem:[#allocation5] sm:$0xff]
        %v224 = vld [vmem:[#allocation5 + $0x8] sm:$0xff]
        %v225 = vld [vmem:[#allocation5 + $0x10] sm:$0xff]
        %v226 = vld [vmem:[#allocation5 + $0x18] sm:$0xff]
        %v227 = vld [vmem:[%s2] sm:$0x1]
        %v229 = vperm.slane %v227, 0
        %vm231 = vcmask 261120
        %v233 = vsel %vm231, %v222, 0
        %235 = vmatpush.msra.mxu0 0.0
        %236 = vmatpush.msra.mxu0 0.0
        %237 = vmatpush.msra.mxu0 0.0
        %238 = vmatpush.msra.mxu0 0.0
        %239 = vmatpush.msra.mxu0 0.0
        %240 = vmatpush.msra.mxu0 0.0
        %241 = vmatpush.msra.mxu0 0.0
        %242 = vmatpush.msra.mxu0 0.0
        %243 = vmatpush.msra.mxu0 0.0
        %244 = vmatpush.msra.mxu0 0.0
        %245 = vmatpush.msra.mxu0 0.0
        %246 = vmatpush.msra.mxu0 0.0
        %247 = vmatpush.msra.mxu0 %v226
        %248 = vmatpush.msra.mxu0 %v225
        %249 = vmatpush.msra.mxu0 %v224
        %250 = vmatpush.msra.mxu0 %v223
        %251 = vmatmul.f32.gmra.mxu0 %v233
        %v252 = vpop.f32.mrf.mxu0
        %v253 = vadd.f32 %v229, %v252
        %254 = vdwg.mxu0
        %vm255 = vcmask 785408
        %256 = vst.msk [vmem:[%s221] sm:$0xff] %vm255, %v253
        %s257 = sand.u32 %s113, 1
        %s258 = scalar_lea.sflag [#allocation4], %s257
        %s259 = sand.u32 %s113, 1
        %s260 = smul.addr %s259, 8
        %s261 = scalar_lea.vmem [#allocation7], %s260
        // Predicated region
        $region41: #{tpu_custom_call.1} parent=31 // pred_check
          %p262 = pneg %p123
        $region42: #{tpu_custom_call.1} parent=31 // pred_check_branch
          %264 = sbr.rel (%p262) target = $region44
        $region43: #{tpu_custom_call.1} parent=31 // pred_region
          %266 = vsyncadd %s258, 0
          %s267 = sadd.s32 %s26, %s25
          %s268 = smul.addr %s267, 8
          %s269 = scalar_lea.hbm %s3, %s268
          %s271 = sshll.u32 %s261, 4
          %s272 = int_to_ptr.vmem [resolvable:$true] %s271
          %s273 = sshll.u32 %s269, 4
          %s274 = int_to_ptr.hbm [resolvable:$true] %s273
          %276 = dma.vmem_to_hbm [thread:$0]  %s272, 128, %s274, %s258
        $region44: #{tpu_custom_call.1} parent=31 // pred_fallthru
          _
      $region32: #{tpu_custom_call.1} parent=5 // pred_fallthru
        _
      %p277 = scmp.le.s32.totalorder 2, %s16
      // Predicated region
      $region45: #{tpu_custom_call.1} parent=5 // pred_check
        %p278 = pneg %p277
      $region46: #{tpu_custom_call.1} parent=5 // pred_check_branch
        %280 = sbr.rel (%p278) target = $region48
      $region47: #{tpu_custom_call.1} parent=5 // pred_region
        %s281 = ssub.s32 %s16, 2
        // Predicated region
        $region49: #{tpu_custom_call.1} parent=47 // pred_check
          %p282 = pneg %p129
        $region50: #{tpu_custom_call.1} parent=47 // pred_check_branch
          %284 = sbr.rel (%p282) target = $region52
        $region51: #{tpu_custom_call.1} parent=47 // pred_region
          %s285 = sand.u32 %s114, 1
          %s286 = scalar_lea.sflag [#allocation4], %s285
          %s287 = sand.u32 %s114, 1
          %s288 = smul.addr %s287, 8
          %s289 = scalar_lea.vmem [#allocation7], %s288
          %291 = dma.done %s286, 128
        $region52: #{tpu_custom_call.1} parent=47 // pred_fallthru
          _
      $region48: #{tpu_custom_call.1} parent=5 // pred_fallthru
        _
    $region6: #{tpu_custom_call.1} parent=1 // loop_footer
      %s20 = sadd.s32 1, %s16
    $region7: #{tpu_custom_call.1} parent=1 // loop_footer_branch
      %15 = sbr.rel target = $region3
    $region8: #{tpu_custom_call.1} parent=1 // loop_exit
      _
    %292 = vsyncpa [#allocation3], 1
    %s293 = scalar_lea.sflag [#allocation3], 1
    %294 = vsyncpa %s293, 1
    %295 = vsyncpa [#allocation6], 1
    %296 = vsyncpa [#allocation4], 1
    %s297 = scalar_lea.sflag [#allocation4], 1
    %298 = vsyncpa %s297, 1

</llo_original>
